<compile_context>
chip_gen: v5e
topology: v5e:2x2
jax: 0.10.0
libtpu: 0.0.40
codegen_flags: <defaults>
</compile_context>

<pallas_src>
import functools

import jax
import jax.numpy as jnp
from jax import lax
from jax.experimental import pallas as pl
from jax.experimental.pallas import tpu as pltpu


# ---------------------------------------------------------------------------
# helpers
# ---------------------------------------------------------------------------
def _pick_tile(dim, target):
    """Tile size: `target` if it divides `dim`, else the full dim (demo fallback)."""
    if dim % target == 0:
        return target
    return dim


def _erf_f32(z):
    # Abramowitz & Stegun 7.1.26 polynomial, |error| <= 1.5e-7.
    # Uses only exp / mul / add / where so it lowers on every TPU generation.
    a1, a2, a3, a4, a5 = 0.254829592, -0.284496736, 1.421413741, -1.453152027, 1.061405429
    p = 0.3275911
    az = jnp.abs(z)
    t = 1.0 / (1.0 + p * az)
    poly = ((((a5 * t + a4) * t + a3) * t + a2) * t + a1) * t
    e = 1.0 - poly * jnp.exp(-az * az)
    return jnp.where(z >= 0, e, -e)


def _gelu_exact(x):
    # erf-based GELU (matches torch.nn.GELU default) via in-kernel erf poly.
    return 0.5 * x * (1.0 + _erf_f32(x * 0.7071067811865476))


# ---------------------------------------------------------------------------
# kernels
# ---------------------------------------------------------------------------
def _ln_linear_kernel(x_ref, g_ref, bln_ref, w_ref, b_ref, o_ref, *, eps, gelu):
    """o = [GELU]( LayerNorm(x) @ w.T + b ) for one (tm, tn) output tile."""
    x = x_ref[...].astype(jnp.float32)
    mean = jnp.mean(x, axis=-1, keepdims=True)
    xc = x - mean
    var = jnp.mean(xc * xc, axis=-1, keepdims=True)
    y = xc * lax.rsqrt(var + eps)
    y = y * g_ref[...].astype(jnp.float32) + bln_ref[...].astype(jnp.float32)
    # Contract LN output with the (out, in) weight along the feature axis
    # (no transpose); accumulate in f32 on the MXU.
    acc = lax.dot_general(
        y.astype(x_ref.dtype), w_ref[...],
        (((1,), (1,)), ((), ())),
        preferred_element_type=jnp.float32)
    acc = acc + b_ref[...].astype(jnp.float32)
    if gelu:
        acc = _gelu_exact(acc)
    o_ref[...] = acc.astype(o_ref.dtype)


def _linear_bias_res_kernel(x_ref, w_ref, b_ref, r_ref, o_ref):
    """o = x @ w.T + b + residual  for one (tm, tn) output tile."""
    acc = lax.dot_general(
        x_ref[...], w_ref[...],
        (((1,), (1,)), ((), ())),
        preferred_element_type=jnp.float32)
    acc = acc + b_ref[...].astype(jnp.float32) + r_ref[...].astype(jnp.float32)
    o_ref[...] = acc.astype(o_ref.dtype)


def _attn_kernel(qkv_ref, o_ref, *, num_heads, head_dim, scale):
    """Multi-head self-attention for one batch element.

    qkv_ref: (1, N, 3C) laid out as [q_h0..q_hH | k_h0..k_hH | v_h0..v_hH]
    o_ref:   (1, N, C)  laid out as [o_h0..o_hH]  (lane-dense single store)
    """
    C = num_heads * head_dim
    outs = []
    for h in range(num_heads):
        qs = h * head_dim
        q = qkv_ref[0, :, qs:qs + head_dim] * scale              # scale folded into q
        k = qkv_ref[0, :, C + qs:C + qs + head_dim]
        v = qkv_ref[0, :, 2 * C + qs:2 * C + qs + head_dim]

        # scores: contract head_dim axes directly (no k.T materialization)
        s = lax.dot_general(q, k, (((1,), (1,)), ((), ())),
                            preferred_element_type=jnp.float32)   # (N, N) f32
        m = jnp.max(s, axis=-1, keepdims=True)
        p = jnp.exp(s - m)
        denom = jnp.sum(p, axis=-1, keepdims=True)
        inv = pl.reciprocal(denom, approx=True)
        inv = inv * (2.0 - denom * inv)                           # one Newton step
        attn = p * inv
        o = jnp.dot(attn.astype(v.dtype), v,
                    preferred_element_type=jnp.float32)           # (N, Dh)
        outs.append(o)
    # single full-width lane-dense store of the (N, C) result
    o_ref[0] = jnp.concatenate(outs, axis=-1).astype(o_ref.dtype)


# ---------------------------------------------------------------------------
# pallas_call wrappers
# ---------------------------------------------------------------------------
def _ln_linear(x, gamma, beta, w, b=None, *, gelu=False, eps=1e-5,
               tm_target=256, tn_target=256):
    M, K = x.shape
    n_out = w.shape[0]
    tm = _pick_tile(M, tm_target)
    tn = _pick_tile(n_out, tn_target)
    gamma2 = gamma.reshape(1, K)
    beta2 = beta.reshape(1, K)
    b2 = (b if b is not None else jnp.zeros((n_out,), x.dtype)).reshape(1, n_out)
    kern = functools.partial(_ln_linear_kernel, eps=eps, gelu=gelu)
    return pl.pallas_call(
        kern,
        out_shape=jax.ShapeDtypeStruct((M, n_out), x.dtype),
        grid=(M // tm, n_out // tn),
        in_specs=[
            pl.BlockSpec((tm, K), lambda i, j: (i, 0)),
            pl.BlockSpec((1, K), lambda i, j: (0, 0)),
            pl.BlockSpec((1, K), lambda i, j: (0, 0)),
            pl.BlockSpec((tn, K), lambda i, j: (j, 0)),
            pl.BlockSpec((1, tn), lambda i, j: (0, j)),
        ],
        out_specs=pl.BlockSpec((tm, tn), lambda i, j: (i, j)),
        compiler_params=pltpu.CompilerParams(
            dimension_semantics=("parallel", "parallel")),
    )(x, gamma2, beta2, w, b2)


def _linear_bias_residual(x, w, b, res, *, tm_target=256, tn_target=256):
    M, K = x.shape
    n_out = w.shape[0]
    tm = _pick_tile(M, tm_target)
    tn = _pick_tile(n_out, tn_target)
    b2 = b.reshape(1, n_out)
    return pl.pallas_call(
        _linear_bias_res_kernel,
        out_shape=jax.ShapeDtypeStruct((M, n_out), x.dtype),
        grid=(M // tm, n_out // tn),
        in_specs=[
            pl.BlockSpec((tm, K), lambda i, j: (i, 0)),
            pl.BlockSpec((tn, K), lambda i, j: (j, 0)),
            pl.BlockSpec((1, tn), lambda i, j: (0, j)),
            pl.BlockSpec((tm, tn), lambda i, j: (i, j)),
        ],
        out_specs=pl.BlockSpec((tm, tn), lambda i, j: (i, j)),
        compiler_params=pltpu.CompilerParams(
            dimension_semantics=("parallel", "parallel")),
    )(x, w, b2, res)


def _attention(qkv, num_heads, head_dim, scale):
    B, N, C3 = qkv.shape
    C = num_heads * head_dim
    kern = functools.partial(_attn_kernel, num_heads=num_heads,
                             head_dim=head_dim, scale=scale)
    return pl.pallas_call(
        kern,
        out_shape=jax.ShapeDtypeStruct((B, N, C), qkv.dtype),
        grid=(B,),
        in_specs=[pl.BlockSpec((1, N, C3), lambda b: (b, 0, 0))],
        out_specs=pl.BlockSpec((1, N, C), lambda b: (b, 0, 0)),
        compiler_params=pltpu.CompilerParams(
            dimension_semantics=("parallel",)),
    )(qkv)


# ---------------------------------------------------------------------------
# Block forward (glue is only free reshapes; all math is inside Pallas)
# ---------------------------------------------------------------------------
def block_forward(x, params, num_heads, eps=1e-5):
    """Equivalent of Block.forward.  x: (B, N, C).  Weights in PyTorch layout."""
    B, N, C = x.shape
    head_dim = C // num_heads
    scale = head_dim ** (-0.5)
    M = B * N
    x_flat = x.reshape(M, C)

    # --- attention branch: x + proj(attn(LN1(x))) ---
    qkv = _ln_linear(x_flat, params["ln1_g"], params["ln1_b"],
                     params["w_qkv"], b=None, gelu=False, eps=eps)     # (M, 3C)
    qkv = qkv.reshape(B, N, 3 * C)                                     # free reshape
    attn_out = _attention(qkv, num_heads, head_dim, scale)             # (B, N, C)
    x1 = _linear_bias_residual(attn_out.reshape(M, C),
                               params["w_proj"], params["b_proj"],
                               x_flat)                                 # (M, C)

    # --- MLP branch: x1 + fc2(GELU(fc1(LN2(x1)))) ---
    h = _ln_linear(x1, params["ln2_g"], params["ln2_b"],
                   params["w_fc1"], b=params["b_fc1"],
                   gelu=True, eps=eps)                                 # (M, Hd)
    out = _linear_bias_residual(h, params["w_fc2"], params["b_fc2"],
                                x1)                                    # (M, C)
    return out.reshape(B, N, C)


# ---------------------------------------------------------------------------
# Pure-JAX reference for verification
# ---------------------------------------------------------------------------
def block_reference(x, params, num_heads, eps=1e-5):
    def ln(v, g, b):
        mean = v.mean(-1, keepdims=True)
        var = ((v - mean) ** 2).mean(-1, keepdims=True)
        return (v - mean) * lax.rsqrt(var + eps) * g + b

    B, N, C = x.shape
    head_dim = C // num_heads
    scale = head_dim ** (-0.5)

    h = ln(x, params["ln1_g"], params["ln1_b"])
    qkv = (h @ params["w_qkv"].T).reshape(B, N, 3, num_heads, head_dim)
    qkv = jnp.transpose(qkv, (2, 0, 3, 1, 4))
    q, k, v = qkv[0], qkv[1], qkv[2]
    attn = jnp.einsum("bhqd,bhkd->bhqk", q, k) * scale
    attn = jax.nn.softmax(attn, axis=-1)
    o = jnp.einsum("bhqk,bhkd->bhqd", attn, v)
    o = jnp.transpose(o, (0, 2, 1, 3)).reshape(B, N, C)
    x = x + (o @ params["w_proj"].T + params["b_proj"])

    h2 = ln(x, params["ln2_g"], params["ln2_b"])
    m = jax.nn.gelu(h2 @ params["w_fc1"].T + params["b_fc1"], approximate=False)
    x = x + (m @ params["w_fc2"].T + params["b_fc2"])
    return x


# ---------------------------------------------------------------------------
if __name__ == "__main__":
    # Small shapes consistent with the module: B=2, N=8 tokens, C=32, 4 heads,
    # mlp_ratio=4 -> hidden=128.
    B, N, C = 2, 8, 32
    num_heads = 4
    hidden = 4 * C

    key = jax.random.PRNGKey(0)
    ks = jax.random.split(key, 12)

    x = jax.random.normal(ks[0], (B, N, C), dtype=jnp.float32)
    params = {
        "ln1_g": 1.0 + 0.05 * jax.random.normal(ks[1], (C,), jnp.float32),
        "ln1_b": 0.05 * jax.random.normal(ks[2], (C,), jnp.float32),
        "w_qkv": 0.05 * jax.random.normal(ks[3], (3 * C, C), jnp.float32),  # (out, in)
        "w_proj": 0.05 * jax.random.normal(ks[4], (C, C), jnp.float32),
        "b_proj": 0.05 * jax.random.normal(ks[5], (C,), jnp.float32),
        "ln2_g": 1.0 + 0.05 * jax.random.normal(ks[6], (C,), jnp.float32),
        "ln2_b": 0.05 * jax.random.normal(ks[7], (C,), jnp.float32),
        "w_fc1": 0.05 * jax.random.normal(ks[8], (hidden, C), jnp.float32),
        "b_fc1": 0.05 * jax.random.normal(ks[9], (hidden,), jnp.float32),
        "w_fc2": 0.05 * jax.random.normal(ks[10], (C, hidden), jnp.float32),
        "b_fc2": 0.05 * jax.random.normal(ks[11], (C,), jnp.float32),
    }

    out = block_forward(x, params, num_heads)
    out = jax.block_until_ready(out)

    ref = block_reference(x, params, num_heads)
    assert out.shape == (B, N, C)
    err = jnp.max(jnp.abs(out - ref))
    assert jnp.allclose(out, ref, atol=1e-4, rtol=1e-4), f"max abs err = {err}"

    # TODO(synk): attn_drop / proj_drop / drop / drop_path are identity at p=0.0
    # (eval); stochastic dropout is intentionally not implemented.
    print("KERNEL_OK")
</pallas_src>

<mosaic_0001>
module attributes {stable_mosaic.version = 11 : i64} {
  func.func @_ln_linear_kernel(%arg0: i32, %arg1: i32, %arg2: memref<16x32xf32, #tpu.memory_space<vmem>>, %arg3: memref<1x32xf32, #tpu.memory_space<vmem>>, %arg4: memref<1x32xf32, #tpu.memory_space<vmem>>, %arg5: memref<96x32xf32, #tpu.memory_space<vmem>>, %arg6: memref<1x96xf32, #tpu.memory_space<vmem>>, %arg7: memref<16x96xf32, #tpu.memory_space<vmem>>) attributes {dimension_semantics = [#tpu.dimension_semantics<parallel>, #tpu.dimension_semantics<parallel>], iteration_bounds = array<i64: 1, 1>, scalar_prefetch = 0 : i64, scratch_operands = 0 : i64, tpu.core_type = #tpu.core_type<tc>, window_params = [{transform_indices = @transform_0, window_bounds = array<i64: 16, 32>}, {pipeline_mode = #tpu.pipeline_mode<synchronous>, transform_indices = @transform_1, window_bounds = array<i64: 1, 32>}, {pipeline_mode = #tpu.pipeline_mode<synchronous>, transform_indices = @transform_2, window_bounds = array<i64: 1, 32>}, {transform_indices = @transform_3, window_bounds = array<i64: 96, 32>}, {transform_indices = @transform_4, window_bounds = array<i64: 1, 96>}, {transform_indices = @transform_5, window_bounds = array<i64: 16, 96>}]} {
    %c0 = arith.constant 0 : index
    %c0_0 = arith.constant 0 : index
    %0 = vector.load %arg2[%c0, %c0_0] : memref<16x32xf32, #tpu.memory_space<vmem>>, vector<16x32xf32>
    %cst = arith.constant dense<0.000000e+00> : vector<16xf32>
    %1 = vector.multi_reduction <add>, %0, %cst [1] : vector<16x32xf32> to vector<16xf32>
    %2 = vector.shape_cast %1 : vector<16xf32> to vector<16x1xf32>
    %cst_1 = arith.constant 3.200000e+01 : f32
    %3 = vector.broadcast %cst_1 : f32 to vector<16x1xf32>
    %4 = arith.divf %2, %3 : vector<16x1xf32>
    %5 = vector.broadcast %4 : vector<16x1xf32> to vector<16x32xf32>
    %6 = arith.subf %0, %5 : vector<16x32xf32>
    %7 = arith.mulf %6, %6 : vector<16x32xf32>
    %cst_2 = arith.constant dense<0.000000e+00> : vector<16xf32>
    %8 = vector.multi_reduction <add>, %7, %cst_2 [1] : vector<16x32xf32> to vector<16xf32>
    %9 = vector.shape_cast %8 : vector<16xf32> to vector<16x1xf32>
    %cst_3 = arith.constant 3.200000e+01 : f32
    %10 = vector.broadcast %cst_3 : f32 to vector<16x1xf32>
    %11 = arith.divf %9, %10 : vector<16x1xf32>
    %cst_4 = arith.constant 9.99999974E-6 : f32
    %12 = vector.broadcast %cst_4 : f32 to vector<16x1xf32>
    %13 = arith.addf %11, %12 : vector<16x1xf32>
    %14 = math.rsqrt %13 : vector<16x1xf32>
    %15 = vector.broadcast %14 : vector<16x1xf32> to vector<16x32xf32>
    %16 = arith.mulf %6, %15 : vector<16x32xf32>
    %c0_5 = arith.constant 0 : index
    %c0_6 = arith.constant 0 : index
    %17 = vector.load %arg3[%c0_5, %c0_6] : memref<1x32xf32, #tpu.memory_space<vmem>>, vector<1x32xf32>
    %18 = vector.broadcast %17 : vector<1x32xf32> to vector<16x32xf32>
    %19 = arith.mulf %16, %18 : vector<16x32xf32>
    %c0_7 = arith.constant 0 : index
    %c0_8 = arith.constant 0 : index
    %20 = vector.load %arg4[%c0_7, %c0_8] : memref<1x32xf32, #tpu.memory_space<vmem>>, vector<1x32xf32>
    %21 = vector.broadcast %20 : vector<1x32xf32> to vector<16x32xf32>
    %22 = arith.addf %19, %21 : vector<16x32xf32>
    %c0_9 = arith.constant 0 : index
    %c0_10 = arith.constant 0 : index
    %23 = vector.load %arg5[%c0_9, %c0_10] : memref<96x32xf32, #tpu.memory_space<vmem>>, vector<96x32xf32>
    %cst_11 = arith.constant dense<0.000000e+00> : vector<16x96xf32>
    %24 = tpu.matmul %22, %23, %cst_11 {dimension_numbers = #tpu.dot_dimension_numbers<[1], [1], [0], [0], [0, 0, 1, 0], [], []>} : vector<16x32xf32>, vector<96x32xf32>, vector<16x96xf32> -> vector<16x96xf32>
    %c0_12 = arith.constant 0 : index
    %c0_13 = arith.constant 0 : index
    %25 = vector.load %arg6[%c0_12, %c0_13] : memref<1x96xf32, #tpu.memory_space<vmem>>, vector<1x96xf32>
    %26 = vector.broadcast %25 : vector<1x96xf32> to vector<16x96xf32>
    %27 = arith.addf %24, %26 : vector<16x96xf32>
    %c0_14 = arith.constant 0 : index
    %c0_15 = arith.constant 0 : index
    %28 = vector.load %arg7[%c0_14, %c0_15] : memref<16x96xf32, #tpu.memory_space<vmem>>, vector<16x96xf32>
    tpu.vector_store %arg7[%c0_14, %c0_15], %27 {strides = array<i32>} : memref<16x96xf32, #tpu.memory_space<vmem>>, vector<16x96xf32>,
    return
  }
  func.func @transform_0(%arg0: i32, %arg1: i32) -> (i32, i32) {
    %c0_i32 = arith.constant 0 : i32
    %c0_i32_0 = arith.constant 0 : i32
    return %arg0, %c0_i32 : i32, i32
  }
  func.func @transform_1(%arg0: i32, %arg1: i32) -> (i32, i32) {
    %c0_i32 = arith.constant 0 : i32
    %c0_i32_0 = arith.constant 0 : i32
    %c0_i32_1 = arith.constant 0 : i32
    return %c0_i32, %c0_i32_0 : i32, i32
  }
  func.func @transform_2(%arg0: i32, %arg1: i32) -> (i32, i32) {
    %c0_i32 = arith.constant 0 : i32
    %c0_i32_0 = arith.constant 0 : i32
    %c0_i32_1 = arith.constant 0 : i32
    return %c0_i32, %c0_i32_0 : i32, i32
  }
  func.func @transform_3(%arg0: i32, %arg1: i32) -> (i32, i32) {
    %c0_i32 = arith.constant 0 : i32
    %c0_i32_0 = arith.constant 0 : i32
    return %arg1, %c0_i32 : i32, i32
  }
  func.func @transform_4(%arg0: i32, %arg1: i32) -> (i32, i32) {
    %c0_i32 = arith.constant 0 : i32
    %c0_i32_0 = arith.constant 0 : i32
    return %c0_i32, %arg1 : i32, i32
  }
  func.func @transform_5(%arg0: i32, %arg1: i32) -> (i32, i32) {
    %c0_i32 = arith.constant 0 : i32
    return %arg0, %arg1 : i32, i32
  }
}

</mosaic_0001>

<llo_original>
// kernel: tpu_custom_call.1
$region0: #{tpu_custom_call.1}
  #allocation0 [shape = 'u32[]', space=smem, size = 0x4, offset = 0x4, fixed_abs, tag = 'smem constant byte address 0x4 - core index']
  #allocation1 [shape = 'u32[72,128]{1,0:T(1,128)}', space=vmem, size = 0x9000, scoped, tag = 'internal scratch']
  %s0 = inlined_call_operand.vmem [shape: f32[16,32], index: 0, kind: input, shape index: {}]
  %s1 = inlined_call_operand.vmem [shape: f32[1,32], index: 1, kind: input, shape index: {}]
  %s2 = inlined_call_operand.vmem [shape: f32[1,32], index: 2, kind: input, shape index: {}]
  %s3 = inlined_call_operand.vmem [shape: f32[96,32], index: 3, kind: input, shape index: {}]
  %s4 = inlined_call_operand.vmem [shape: f32[1,96], index: 4, kind: input, shape index: {}]
  %s5 = inlined_call_operand.hbm [shape: f32[16,96], index: 5, kind: output, shape index: {}]
  %s6 = sld [smem:[#allocation0]]
  $region30: #{tpu_custom_call.1} parent=0
    _
  %s8 = ssub.s32 1, %s6
  %s9 = scalar_select 0, %s8, %s6
  $region1: #{tpu_custom_call.1} parent=0
    #allocation2 [shape = 'u8[8192]{0}', space=vmem, size = 0x2000, scoped, tag = 'output window, operand 0, single buffered']
    #allocation3 [shape = 's32[1]{0}', space=sflag, size = 0x4, scoped, tag = 'scoped memory for tpu_custom_call.1']
    %10 = vsyncpa [#allocation3], 0
    // Predicated region
    $region2: #{tpu_custom_call.1} parent=1 // pred_check
      _
    $region3: #{tpu_custom_call.1} parent=1 // pred_check_branch
      %12 = sbr.rel (0) target = $region5
    $region4: #{tpu_custom_call.1} parent=1 // pred_region
      _
    $region5: #{tpu_custom_call.1} parent=1 // pred_fallthru
      _
    // Predicated region
    $region6: #{tpu_custom_call.1} parent=1 // pred_check
      _
    $region7: #{tpu_custom_call.1} parent=1 // pred_check_branch
      %14 = sbr.rel (0) target = $region9
    $region8: #{tpu_custom_call.1} parent=1 // pred_region
      _
    $region9: #{tpu_custom_call.1} parent=1 // pred_fallthru
      _
    // Predicated region
    $region10: #{tpu_custom_call.1} parent=1 // pred_check
      _
    $region11: #{tpu_custom_call.1} parent=1 // pred_check_branch
      %16 = sbr.rel (0) target = $region13
    $region12: #{tpu_custom_call.1} parent=1 // pred_region
      _
    $region13: #{tpu_custom_call.1} parent=1 // pred_fallthru
      _
    // Predicated region
    $region14: #{tpu_custom_call.1} parent=1 // pred_check
      _
    $region15: #{tpu_custom_call.1} parent=1 // pred_check_branch
      %18 = sbr.rel (0) target = $region17
    $region16: #{tpu_custom_call.1} parent=1 // pred_region
      _
    $region17: #{tpu_custom_call.1} parent=1 // pred_fallthru
      _
    // Predicated region
    $region18: #{tpu_custom_call.1} parent=1 // pred_check
      _
    $region19: #{tpu_custom_call.1} parent=1 // pred_check_branch
      %20 = sbr.rel (0) target = $region21
    $region20: #{tpu_custom_call.1} parent=1 // pred_region
      _
    $region21: #{tpu_custom_call.1} parent=1 // pred_fallthru
      _
    %v21 = vld [vmem:[%s0] sm:$0xff]
    %v22 = vld [vmem:[%s0 + $0x8] sm:$0xff]
    %vm23 = vcmask 261120
    %v24 = vsel %vm23, %v21, 0.0
    %25 = vadd.xlane.f32.xlu0 %v24
    %v26 = vpop.xlane.xlu0 %25
    %v27 = vsel %vm23, %v22, 0.0
    %28 = vadd.xlane.f32.xlu0 %v27
    %v29 = vpop.xlane.xlu0 %28
    %v30 = vrcp.pop 32.0
    %v31 = vmul.f32 32.0, %v30
    %v32 = vsub.f32 1.0, %v31
    %v33 = vmul.f32 %v30, %v32
    %v34 = vadd.f32 %v30, %v33
    %vm35 = vweird.f32 %v30
    %v36 = vsel %vm35, %v30, %v34
    %v37 = vmul.f32 %v26, %v36
    %v38 = vmul.f32 %v29, %v36
    %v39 = vsub.f32 %v21, %v37
    %v40 = vsub.f32 %v22, %v38
    %v41 = vmul.f32 %v39, %v39
    %v42 = vmul.f32 %v40, %v40
    %v43 = vsel %vm23, %v41, 0.0
    %44 = vadd.xlane.f32.xlu0 %v43
    %v45 = vpop.xlane.xlu0 %44
    %v46 = vsel %vm23, %v42, 0.0
    %47 = vadd.xlane.f32.xlu0 %v46
    %v48 = vpop.xlane.xlu0 %47
    %v49 = vmul.f32 %v45, %v36
    %v50 = vmul.f32 %v48, %v36
    %v51 = vadd.f32 %v49, 1e-05
    %v52 = vadd.f32 %v50, 1e-05
    %v53 = vrsqrt.pop %v51
    %v54 = vmul.f32 %v53, %v51
    %v55 = vmul.f32 %v54, %v53
    %v56 = vmul.f32 0.5, %v55
    %v57 = vsub.f32 1.5, %v56
    %v58 = vmul.f32 %v53, %v57
    %vm59 = vweird.f32 %v51
    %vm60 = vweird.f32 %v53
    %vm61 = vmor %vm59, %vm60
    %v62 = vsel %vm61, %v53, %v58
    %v63 = vrsqrt.pop %v52
    %v64 = vmul.f32 %v63, %v52
    %v65 = vmul.f32 %v64, %v63
    %v66 = vmul.f32 0.5, %v65
    %v67 = vsub.f32 1.5, %v66
    %v68 = vmul.f32 %v63, %v67
    %vm69 = vweird.f32 %v52
    %vm70 = vweird.f32 %v63
    %vm71 = vmor %vm69, %vm70
    %v72 = vsel %vm71, %v63, %v68
    %v73 = vmul.f32 %v39, %v62
    %v74 = vmul.f32 %v40, %v72
    %v75 = vld [vmem:[%s1] sm:$0x1]
    %v77 = vperm.slane %v75, 0
    %v79 = vmul.f32 %v73, %v77
    %v80 = vmul.f32 %v74, %v77
    %v81 = vld [vmem:[%s2] sm:$0x1]
    %v83 = vperm.slane %v81, 0
    %v85 = vadd.f32 %v79, %v83
    %v86 = vadd.f32 %v80, %v83
    %v87 = vld [vmem:[%s3] sm:$0xff]
    %v88 = vld [vmem:[%s3 + $0x8] sm:$0xff]
    %v89 = vld [vmem:[%s3 + $0x10] sm:$0xff]
    %v90 = vld [vmem:[%s3 + $0x18] sm:$0xff]
    %v91 = vld [vmem:[%s3 + $0x20] sm:$0xff]
    %v92 = vld [vmem:[%s3 + $0x28] sm:$0xff]
    %v93 = vld [vmem:[%s3 + $0x30] sm:$0xff]
    %v94 = vld [vmem:[%s3 + $0x38] sm:$0xff]
    %v95 = vld [vmem:[%s3 + $0x40] sm:$0xff]
    %v96 = vld [vmem:[%s3 + $0x48] sm:$0xff]
    %v97 = vld [vmem:[%s3 + $0x50] sm:$0xff]
    %v98 = vld [vmem:[%s3 + $0x58] sm:$0xff]
    %v99 = vld [vmem:[%s4] sm:$0x1]
    %v101 = vperm.slane %v99, 0
    %v104 = vsel %vm23, %v85, 0
    %v107 = vsel %vm23, %v86, 0
    %v110 = vsel %vm23, %v87, 0
    %v113 = vsel %vm23, %v88, 0
    %v116 = vsel %vm23, %v89, 0
    %v119 = vsel %vm23, %v90, 0
    %v122 = vsel %vm23, %v91, 0
    %v125 = vsel %vm23, %v92, 0
    %v128 = vsel %vm23, %v93, 0
    %v131 = vsel %vm23, %v94, 0
    %v134 = vsel %vm23, %v95, 0
    %v137 = vsel %vm23, %v96, 0
    %v140 = vsel %vm23, %v97, 0
    %v143 = vsel %vm23, %v98, 0
    %145 = vmatpush.xpose.msra.mxu0 0.0
    %146 = vmatpush.xpose.msra.mxu0 0.0
    %147 = vmatpush.xpose.msra.mxu0 0.0
    %148 = vmatpush.xpose.msra.mxu0 0.0
    %149 = vmatpush.xpose.msra.mxu0 %v143
    %150 = vmatpush.xpose.msra.mxu0 %v140
    %151 = vmatpush.xpose.msra.mxu0 %v137
    %152 = vmatpush.xpose.msra.mxu0 %v134
    %153 = vmatpush.xpose.msra.mxu0 %v131
    %154 = vmatpush.xpose.msra.mxu0 %v128
    %155 = vmatpush.xpose.msra.mxu0 %v125
    %156 = vmatpush.xpose.msra.mxu0 %v122
    %157 = vmatpush.xpose.msra.mxu0 %v119
    %158 = vmatpush.xpose.msra.mxu0 %v116
    %159 = vmatpush.xpose.msra.mxu0 %v113
    %160 = vmatpush.xpose.msra.mxu0 %v110
    %161 = vmatmul.f32.gmra.mxu0 %v104
    %v162 = vpop.f32.mrf.mxu0
    %v163 = vadd.f32 %v101, %v162
    %164 = vmatmul.f32.gmra.mxu0 %v107
    %v165 = vpop.f32.mrf.mxu0
    %v166 = vadd.f32 %v101, %v165
    %167 = vdwg.mxu0
    %vm168 = vcmask 785408
    %169 = vst.msk [vmem:[#allocation2] sm:$0xff] %vm168, %v163
    %170 = vst.msk [vmem:[#allocation2 + $0x8] sm:$0xff] %vm168, %v166
    // Predicated region
    $region22: #{tpu_custom_call.1} parent=1 // pred_check
      _
    $region23: #{tpu_custom_call.1} parent=1 // pred_check_branch
      %172 = sbr.rel (0) target = $region25
    $region24: #{tpu_custom_call.1} parent=1 // pred_region
      %174 = vsyncadd [#allocation3], 0
      %s175 = sshll.u32 [#allocation2], 4
      %s176 = int_to_ptr.vmem [resolvable:$true] %s175
      %s177 = sshll.u32 %s5, 4
      %s178 = int_to_ptr.hbm [resolvable:$true] %s177
      %183 = dma.vmem_to_hbm [thread:$0]  %s176, 256, %s178, [#allocation3], 128, 128, 8
    $region25: #{tpu_custom_call.1} parent=1 // pred_fallthru
      _
    // Predicated region
    $region26: #{tpu_custom_call.1} parent=1 // pred_check
      _
    $region27: #{tpu_custom_call.1} parent=1 // pred_check_branch
      %185 = sbr.rel (0) target = $region29
    $region28: #{tpu_custom_call.1} parent=1 // pred_region
      %187 = dma.done [#allocation3], 256
    $region29: #{tpu_custom_call.1} parent=1 // pred_fallthru
      _
    %188 = vsyncpa [#allocation3], 1

</llo_original>
